<compile_context>
chip_gen: v5e
topology: v5e:2x2
jax: 0.10.0
libtpu: 0.0.40
codegen_flags: <defaults>
</compile_context>

<pallas_src>
import functools

import jax
import jax.numpy as jnp
from jax.experimental import pallas as pl
from jax.experimental.pallas import tpu as pltpu

_MAX_CORES = 2        # v7x has 2 TensorCores per chip
_LANES = 128


def _triplet_kernel(*refs, margin, tb, b_valid, tiles_per_core, k):
    if k > 1:
        a_ref, p_ref, n_ref, seg_ref, out_ref = refs
    else:
        a_ref, p_ref, n_ref, out_ref = refs

    c = pl.program_id(0)          # partial-sum slot (one per core)
    t = pl.program_id(1)          # reduction step over this core's batch tiles

    @pl.when(t == 0)
    def _():
        out_ref[...] = jnp.zeros_like(out_ref)

    a = a_ref[...].astype(jnp.float32)
    p = p_ref[...].astype(jnp.float32)
    n = n_ref[...].astype(jnp.float32)

    dap = a - p
    dan = a - n
    delta = dap * dap - dan * dan          # (tb, k*d); a row-segment sum gives dp - dn

    if k > 1:
        # k original rows packed per lane-row; reduce each length-d lane segment with a
        # 0/1 matmul against the resident seg matrix (MXU is idle; HIGHEST ~ f32 accuracy).
        seg = jnp.dot(delta, seg_ref[...],
                      preferred_element_type=jnp.float32,
                      precision=jax.lax.Precision.HIGHEST)      # (tb, k)
    else:
        seg = jnp.sum(delta, axis=1, keepdims=True)             # (tb, 1)

    losses = jnp.maximum(seg + margin, 0.0)

    # Mask at ORIGINAL-row granularity: covers the ragged last tile (garbage rows), the
    # clamped duplicate tiles a core may be handed, and wrapper-side zero-padded rows.
    # Must be applied BEFORE the reduction so NaN/Inf garbage is replaced, not multiplied.
    tile = c * tiles_per_core + t                                # un-clamped logical tile id
    row = jax.lax.broadcasted_iota(jnp.int32, losses.shape, 0)
    col = jax.lax.broadcasted_iota(jnp.int32, losses.shape, 1)
    orig_row = (tile * tb + row) * k + col
    losses = jnp.where(orig_row < b_valid, losses, 0.0)

    # Broadcast-accumulate the scalar partial into this core's resident (8,128) block
    # (exactly one vreg); every element of the block ends up equal to the core's total.
    out_ref[...] += jnp.sum(losses)


def triplet_margin_loss(anchor, positive, negative, margin=1.0, block_rows=None):
    B, D = anchor.shape
    assert positive.shape == (B, D) and negative.shape == (B, D)
    orig_b = B

    itemsize = jnp.dtype(anchor.dtype).itemsize

    # ---- lane-dense packing for small feature dims: (B, D) -> (ceil(B/k), k*D) ----------
    k = 1
    if D < _LANES and _LANES % D == 0:
        k = _LANES // D
        pad = (-B) % k
        if pad:
            # One extra HBM pass (XLA materialises the pad), but it keeps the streamed
            # blocks lane-dense, worth up to ~k x DMA efficiency for small D.  The padded
            # (zero) rows are masked in-kernel at original-row granularity.
            cfg = ((0, pad), (0, 0))
            anchor = jnp.pad(anchor, cfg)
            positive = jnp.pad(positive, cfg)
            negative = jnp.pad(negative, cfg)
        packed_b = (B + pad) // k
        packed_d = k * D
        anchor = anchor.reshape(packed_b, packed_d)
        positive = positive.reshape(packed_b, packed_d)
        negative = negative.reshape(packed_b, packed_d)
    else:
        # TODO(synk): D that neither divides 128 nor reaches it (e.g. 48) still streams
        # lane-sparse; packing it would need a feature-dim pad, which rarely pays off.
        packed_b, packed_d = B, D

    # ---- per-generation core count and VMEM budget --------------------------------------
    kind = ""
    try:
        kind = jax.devices()[0].device_kind.lower()
    except Exception:
        pass
    single_tc = any(s in kind for s in
                    ("v5e", "v5 lite", "v5lite", "v6e", "v6 lite", "v6lite"))
    num_cores = 1 if single_tc else _MAX_CORES
    if ("v5" in kind) or ("v6" in kind):
        # v5e/v5p/v6e: 128 MiB physical VMEM -> big tiles, explicit limit above the default.
        vmem_budget, vmem_limit = 64 << 20, 96 << 20
    else:
        # v7x (64 MiB per TC) or unknown: conservative so double-buffering never OOMs.
        vmem_budget, vmem_limit = 36 << 20, 48 << 20

    # ---- tile rows: as large as the VMEM budget allows (kernel is HBM-streaming bound) --
    sublane = max(8, 32 // itemsize)                    # 8 for f32, 16 for bf16
    padded_d = pl.cdiv(packed_d, _LANES) * _LANES       # lanes the (8,128) VMEM tiling stores
    if block_rows is None:
        # 3 inputs x 2 pipeline buffers (input dtype) + ~5 f32-sized elementwise temps/row.
        bytes_per_row = padded_d * (3 * 2 * itemsize + 5 * 4)
        tb = vmem_budget // bytes_per_row
    else:
        tb = int(block_rows)
    tb = max(sublane, (tb // sublane) * sublane)
    tb = min(tb, packed_b)                              # full-extent block for small batches

    n_tiles = pl.cdiv(packed_b, tb)
    tiles_per_core = pl.cdiv(n_tiles, num_cores)

    def in_map(c, t):
        # Clamp so the DMA never reads fully out of bounds; duplicate tiles are masked.
        return (jnp.minimum(c * tiles_per_core + t, n_tiles - 1), 0)

    in_spec = pl.BlockSpec((tb, packed_d), in_map)
    in_specs = [in_spec, in_spec, in_spec]
    args = [anchor, positive, negative]

    if k > 1:
        # 0/1 lane-segment reduction matrix; constant index_map => fetched once and kept
        # VMEM-resident instead of re-materialising iotas/compares on every grid step.
        lane = jnp.arange(k * D, dtype=jnp.int32)[:, None]
        segid = jnp.arange(k, dtype=jnp.int32)[None, :]
        seg_mat = (lane // D == segid).astype(jnp.float32)        # (k*D, k)
        in_specs.append(pl.BlockSpec((k * D, k), lambda c, t: (0, 0)))
        args.append(seg_mat)

    out_spec = pl.BlockSpec((8, _LANES), lambda c, t: (c, 0))

    kernel = functools.partial(
        _triplet_kernel, margin=float(margin), tb=tb, b_valid=orig_b,
        tiles_per_core=tiles_per_core, k=k)

    cost = pl.CostEstimate(
        flops=8 * packed_b * packed_d,
        transcendentals=0,
        bytes_accessed=3 * packed_b * packed_d * itemsize + num_cores * 8 * _LANES * 4)

    # TODO(synk): on v7x, verify the leading "parallel" axis really shards across both
    # TensorCores; if xprof shows one TC idle, switch to pltpu.CORE_PARALLEL / pl.core_map.
    partials = pl.pallas_call(
        kernel,
        out_shape=jax.ShapeDtypeStruct((num_cores * 8, _LANES), jnp.float32),
        grid_spec=pltpu.PrefetchScalarGridSpec(
            num_scalar_prefetch=0,
            grid=(num_cores, tiles_per_core),
            in_specs=in_specs,
            out_specs=out_spec,
        ),
        compiler_params=pltpu.CompilerParams(
            dimension_semantics=("parallel", "arbitrary"),
            vmem_limit_bytes=vmem_limit,
        ),
        cost_estimate=cost,
    )(*args)

    # Every element of core c's (8,128) block equals that core's partial sum.
    return jnp.sum(partials[::8, 0]) / orig_b


def _reference(a, p, n, margin):
    a = a.astype(jnp.float32); p = p.astype(jnp.float32); n = n.astype(jnp.float32)
    dp = jnp.sum((a - p) ** 2, axis=1)
    dn = jnp.sum((a - n) ** 2, axis=1)
    return jnp.mean(jnp.maximum(dp - dn + margin, 0.0))


if __name__ == "__main__":
    key = jax.random.PRNGKey(0)
    k1, k2, k3 = jax.random.split(key, 3)

    # Check 1: small embeddings (packed D=32 path, B divisible by k).
    B, D = 8, 32
    a = jax.random.normal(k1, (B, D), dtype=jnp.float32)
    p = jax.random.normal(k2, (B, D), dtype=jnp.float32)
    n = jax.random.normal(k3, (B, D), dtype=jnp.float32)
    loss = triplet_margin_loss(a, p, n, margin=1.0)
    jax.block_until_ready(loss)
    ref = _reference(a, p, n, 1.0)
    assert jnp.allclose(loss, ref, rtol=1e-5, atol=1e-5), (loss, ref)

    # Check 2: ragged batch + multi-tile reduction path (masking, per-core tiles, no packing).
    B2, D2 = 36, 256
    a2 = jax.random.normal(k1, (B2, D2), dtype=jnp.float32)
    p2 = jax.random.normal(k2, (B2, D2), dtype=jnp.float32)
    n2 = jax.random.normal(k3, (B2, D2), dtype=jnp.float32)
    loss2 = triplet_margin_loss(a2, p2, n2, margin=0.5, block_rows=8)
    jax.block_until_ready(loss2)
    ref2 = _reference(a2, p2, n2, 0.5)
    assert jnp.allclose(loss2, ref2, rtol=1e-4, atol=1e-4), (loss2, ref2)

    # Check 3: generalized packing path (B not divisible by k -> zero-pad + row/col mask).
    B3, D3 = 10, 32
    a3 = jax.random.normal(k2, (B3, D3), dtype=jnp.float32)
    p3 = jax.random.normal(k3, (B3, D3), dtype=jnp.float32)
    n3 = jax.random.normal(k1, (B3, D3), dtype=jnp.float32)
    loss3 = triplet_margin_loss(a3, p3, n3, margin=1.0)
    jax.block_until_ready(loss3)
    ref3 = _reference(a3, p3, n3, 1.0)
    assert jnp.allclose(loss3, ref3, rtol=1e-5, atol=1e-5), (loss3, ref3)

    print("KERNEL_OK")
</pallas_src>

<mosaic_0001>
module attributes {stable_mosaic.version = 11 : i64} {
  func.func @_triplet_kernel(%arg0: i32, %arg1: i32, %arg2: memref<2x128xf32, #tpu.memory_space<vmem>>, %arg3: memref<2x128xf32, #tpu.memory_space<vmem>>, %arg4: memref<2x128xf32, #tpu.memory_space<vmem>>, %arg5: memref<128x4xf32, #tpu.memory_space<vmem>>, %arg6: memref<8x128xf32, #tpu.memory_space<vmem>>) attributes {dimension_semantics = [#tpu.dimension_semantics<parallel>, #tpu.dimension_semantics<arbitrary>], iteration_bounds = array<i64: 2, 1>, scalar_prefetch = 0 : i64, scratch_operands = 0 : i64, tpu.core_type = #tpu.core_type<tc>, window_params = [{transform_indices = @transform_0, window_bounds = array<i64: 2, 128>}, {transform_indices = @transform_1, window_bounds = array<i64: 2, 128>}, {transform_indices = @transform_2, window_bounds = array<i64: 2, 128>}, {pipeline_mode = #tpu.pipeline_mode<synchronous>, transform_indices = @transform_3, window_bounds = array<i64: 128, 4>}, {transform_indices = @transform_4, window_bounds = array<i64: 8, 128>}]} {
    %c0_i32 = arith.constant 0 : i32
    %0 = arith.cmpi eq, %arg1, %c0_i32 : i32
    %1 = arith.extui %0 : i1 to i32
    %c0_i32_0 = arith.constant 0 : i32
    %2 = arith.cmpi ne, %1, %c0_i32_0 : i32
    scf.if %2 {
      %cst_16 = arith.constant 0.000000e+00 : f32
      %39 = vector.broadcast %cst_16 : f32 to vector<8x128xf32>
      %c0_17 = arith.constant 0 : index
      %c0_18 = arith.constant 0 : index
      %40 = vector.load %arg6[%c0_17, %c0_18] : memref<8x128xf32, #tpu.memory_space<vmem>>, vector<8x128xf32>
      tpu.vector_store %arg6[%c0_17, %c0_18], %39 {strides = array<i32>} : memref<8x128xf32, #tpu.memory_space<vmem>>, vector<8x128xf32>,
    } else {
    }
    %c0 = arith.constant 0 : index
    %c0_1 = arith.constant 0 : index
    %3 = vector.load %arg2[%c0, %c0_1] : memref<2x128xf32, #tpu.memory_space<vmem>>, vector<2x128xf32>
    %c0_2 = arith.constant 0 : index
    %c0_3 = arith.constant 0 : index
    %4 = vector.load %arg3[%c0_2, %c0_3] : memref<2x128xf32, #tpu.memory_space<vmem>>, vector<2x128xf32>
    %c0_4 = arith.constant 0 : index
    %c0_5 = arith.constant 0 : index
    %5 = vector.load %arg4[%c0_4, %c0_5] : memref<2x128xf32, #tpu.memory_space<vmem>>, vector<2x128xf32>
    %6 = arith.subf %3, %4 : vector<2x128xf32>
    %7 = arith.subf %3, %5 : vector<2x128xf32>
    %8 = arith.mulf %6, %6 : vector<2x128xf32>
    %9 = arith.mulf %7, %7 : vector<2x128xf32>
    %10 = arith.subf %8, %9 : vector<2x128xf32>
    %c0_6 = arith.constant 0 : index
    %c0_7 = arith.constant 0 : index
    %11 = vector.load %arg5[%c0_6, %c0_7] : memref<128x4xf32, #tpu.memory_space<vmem>>, vector<128x4xf32>
    %cst = arith.constant dense<0.000000e+00> : vector<2x4xf32>
    %12 = tpu.matmul %10, %11, %cst {dimension_numbers = #tpu.dot_dimension_numbers<[1], [0], [0], [1], [0, 0, 1, 1], [], []>, precision = #tpu.contract_precision<fp32>} : vector<2x128xf32>, vector<128x4xf32>, vector<2x4xf32> -> vector<2x4xf32>
    %cst_8 = arith.constant 1.000000e+00 : f32
    %13 = vector.broadcast %cst_8 : f32 to vector<2x4xf32>
    %14 = arith.addf %12, %13 : vector<2x4xf32>
    %cst_9 = arith.constant 0.000000e+00 : f32
    %15 = vector.broadcast %cst_9 : f32 to vector<2x4xf32>
    %16 = arith.maximumf %14, %15 : vector<2x4xf32>
    %c1_i32 = arith.constant 1 : i32
    %17 = arith.muli %arg0, %c1_i32 : i32
    %18 = arith.addi %17, %arg1 : i32
    %19 = tpu.iota {dimensions = array<i32: 0>} : vector<2x4xi32>
    %20 = tpu.iota {dimensions = array<i32: 1>} : vector<2x4xi32>
    %c2_i32 = arith.constant 2 : i32
    %21 = arith.muli %18, %c2_i32 : i32
    %22 = vector.broadcast %21 : i32 to vector<2x4xi32>
    %23 = arith.addi %22, %19 : vector<2x4xi32>
    %c4_i32 = arith.constant 4 : i32
    %24 = vector.broadcast %c4_i32 : i32 to vector<2x4xi32>
    %25 = arith.muli %23, %24 : vector<2x4xi32>
    %26 = arith.addi %25, %20 : vector<2x4xi32>
    %c8_i32 = arith.constant 8 : i32
    %27 = vector.broadcast %c8_i32 : i32 to vector<2x4xi32>
    %28 = arith.cmpi slt, %26, %27 : vector<2x4xi32>
    %cst_10 = arith.constant 0.000000e+00 : f32
    %29 = vector.broadcast %cst_10 : f32 to vector<2x4xf32>
    %30 = arith.select %28, %16, %29 : vector<2x4xi1>, vector<2x4xf32>
    %c0_11 = arith.constant 0 : index
    %c0_12 = arith.constant 0 : index
    %31 = vector.load %arg6[%c0_11, %c0_12] : memref<8x128xf32, #tpu.memory_space<vmem>>, vector<8x128xf32>
    %32 = vector.shape_cast %30 : vector<2x4xf32> to vector<1x2x4xf32>
    %cst_13 = arith.constant dense<0.000000e+00> : vector<1xf32>
    %33 = vector.multi_reduction <add>, %32, %cst_13 [1, 2] : vector<1x2x4xf32> to vector<1xf32>
    %34 = vector.shape_cast %33 : vector<1xf32> to vector<1x1x1xf32>
    %35 = vector.extract %34[0, 0, 0] : f32 from vector<1x1x1xf32>
    %36 = vector.broadcast %35 : f32 to vector<8x128xf32>
    %37 = arith.addf %31, %36 : vector<8x128xf32>
    %c0_14 = arith.constant 0 : index
    %c0_15 = arith.constant 0 : index
    %38 = vector.load %arg6[%c0_14, %c0_15] : memref<8x128xf32, #tpu.memory_space<vmem>>, vector<8x128xf32>
    tpu.vector_store %arg6[%c0_14, %c0_15], %37 {strides = array<i32>} : memref<8x128xf32, #tpu.memory_space<vmem>>, vector<8x128xf32>,
    return
  }
  func.func @transform_0(%arg0: i32, %arg1: i32) -> (i32, i32) {
    %c1_i32 = arith.constant 1 : i32
    %0 = arith.muli %arg0, %c1_i32 : i32
    %1 = arith.addi %0, %arg1 : i32
    %c0_i32 = arith.constant 0 : i32
    %2 = arith.minsi %1, %c0_i32 : i32
    %c0_i32_0 = arith.constant 0 : i32
    %c0_i32_1 = arith.constant 0 : i32
    return %2, %c0_i32_0 : i32, i32
  }
  func.func @transform_1(%arg0: i32, %arg1: i32) -> (i32, i32) {
    %c1_i32 = arith.constant 1 : i32
    %0 = arith.muli %arg0, %c1_i32 : i32
    %1 = arith.addi %0, %arg1 : i32
    %c0_i32 = arith.constant 0 : i32
    %2 = arith.minsi %1, %c0_i32 : i32
    %c0_i32_0 = arith.constant 0 : i32
    %c0_i32_1 = arith.constant 0 : i32
    return %2, %c0_i32_0 : i32, i32
  }
  func.func @transform_2(%arg0: i32, %arg1: i32) -> (i32, i32) {
    %c1_i32 = arith.constant 1 : i32
    %0 = arith.muli %arg0, %c1_i32 : i32
    %1 = arith.addi %0, %arg1 : i32
    %c0_i32 = arith.constant 0 : i32
    %2 = arith.minsi %1, %c0_i32 : i32
    %c0_i32_0 = arith.constant 0 : i32
    %c0_i32_1 = arith.constant 0 : i32
    return %2, %c0_i32_0 : i32, i32
  }
  func.func @transform_3(%arg0: i32, %arg1: i32) -> (i32, i32) {
    %c0_i32 = arith.constant 0 : i32
    %c0_i32_0 = arith.constant 0 : i32
    %c0_i32_1 = arith.constant 0 : i32
    return %c0_i32, %c0_i32_0 : i32, i32
  }
  func.func @transform_4(%arg0: i32, %arg1: i32) -> (i32, i32) {
    %c0_i32 = arith.constant 0 : i32
    %c0_i32_0 = arith.constant 0 : i32
    return %arg0, %c0_i32 : i32, i32
  }
}

</mosaic_0001>

<llo_original>
// kernel: tpu_custom_call.1
$region0: #{tpu_custom_call.1}
  #allocation0 [shape = 'u32[]', space=smem, size = 0x4, offset = 0x4, fixed_abs, tag = 'smem constant byte address 0x4 - core index']
  #allocation1 [shape = 'u32[72,128]{1,0:T(1,128)}', space=vmem, size = 0x9000, scoped, tag = 'internal scratch']
  %s0 = inlined_call_operand.vmem [shape: f32[2,128], index: 0, kind: input, shape index: {}]
  %s1 = inlined_call_operand.vmem [shape: f32[2,128], index: 1, kind: input, shape index: {}]
  %s2 = inlined_call_operand.vmem [shape: f32[2,128], index: 2, kind: input, shape index: {}]
  %s3 = inlined_call_operand.vmem [shape: f32[128,4], index: 3, kind: input, shape index: {}]
  %s4 = inlined_call_operand.hbm [shape: f32[16,128], index: 4, kind: output, shape index: {}]
  %s5 = sld [smem:[#allocation0]]
  $region53: #{tpu_custom_call.1} parent=0
    _
  %s7 = ssub.s32 1, %s5
  %s8 = scalar_select 0, %s7, %s5
  $region1: #{tpu_custom_call.1} parent=0
    #allocation2 [shape = 'u8[8192]{0}', space=vmem, size = 0x2000, scoped, tag = 'output window, operand 0']
    #allocation3 [shape = 's32[2]{0}', space=sflag, size = 0x8, scoped, tag = 'scoped memory for tpu_custom_call.1']
    %9 = vsyncpa [#allocation3], 0
    %s10 = scalar_lea.sflag [#allocation3], 1
    %11 = vsyncpa %s10, 0
    loop: start=0, step=1, limit=4
    $region2: #{tpu_custom_call.1} parent=1 // loop_pre_header
      _
    $region3: #{tpu_custom_call.1} parent=1 // loop_header
      %s13 = sphi 0, %s17
      %p14 = scmp.ge.s32.totalorder %s13, 4
      %s20 = sphi 0, %s32
      %s21 = sphi 0, %s28
      %s22 = sphi 0, %s20
      %s23 = sphi 0, %s21
      %s24 = sphi 0, %s22
      %s25 = sphi 0, %s23
      %s41 = sphi 0, %s43
      %s44 = sphi 0, %s41
      %s45 = sphi 0, %s44
      %s61 = sphi 0, %s45
      %s73 = sphi 0, %s75
      %s76 = sphi 0, %s73
      %s77 = sphi 0, %s76
      %s93 = sphi 0, %s77
      %s105 = sphi 0, %s107
      %s108 = sphi 0, %s105
      %s109 = sphi 0, %s108
      %s125 = sphi 0, %s109
      %s129 = sphi 0, %s129
      %s131 = sphi 0, %s129
      %s132 = sphi 0, %s131
      %s146 = sphi 0, %s132
      %s152 = sphi 0, %s154
      %s155 = sphi 0, %s152
      %s156 = sphi 0, %s155
      %s172 = sphi 0, %s156
    $region4: #{tpu_custom_call.1} parent=1 // loop_header_branch
      %16 = sbr.rel (%p14) target = $region8
    $region5: #{tpu_custom_call.1} parent=1 // loop_body
      %s18 = ssub.s32 %s13, 1
      %s19 = ssub.s32 %s13, 2
      %s26 = sadd.s32 1, %s21
      %p27 = scmp.ge.s32.totalorder %s26, 1
      %s28 = scalar_select %p27, 0, %s26
      %s29 = sadd.s32 1, %s20
      %s30 = scalar_select %p27, %s29, %s20
      %p31 = scmp.ge.s32.totalorder %s30, 2
      %s32 = scalar_select %p31, 0, %s30
      %s33 = sadd.s32 %s20, %s21
      %p34 = scmp.lt.s32.totalorder %s33, 0
      %s35 = scalar_select %p34, %s33, 0
      %s36 = sadd.s32 %s32, %s28
      %p37 = scmp.lt.s32.totalorder %s36, 0
      %s38 = scalar_select %p37, %s36, 0
      %s39 = ssub.s32 %s35, %s38
      %p40 = scmp.eq.s32.totalorder %s39, 0
      %s42 = sadd.s32 %s41, 1
      %s43 = scalar_select %p40, %s41, %s42
      %p46 = pneg %p40
      %p47 = scmp.eq.s32.totalorder %s13, 1
      %p48 = por %p46, %p47
      %p49 = scmp.ne.s32.totalorder %s41, %s44
      %p50 = scmp.eq.s32.totalorder %s13, 0
      %p51 = por %p49, %p50
      %p52 = scmp.ne.s32.totalorder %s41, %s44
      %p53 = scmp.eq.s32.totalorder %s18, 1
      %p54 = por %p52, %p53
      %p55 = scmp.ne.s32.totalorder %s44, %s45
      %p56 = scmp.eq.s32.totalorder %s18, 0
      %p57 = por %p55, %p56
      %p58 = scmp.ne.s32.totalorder %s44, %s45
      %p59 = scmp.eq.s32.totalorder %s19, 1
      %p60 = por %p58, %p59
      %p62 = scmp.ne.s32.totalorder %s45, %s61
      %p63 = scmp.eq.s32.totalorder %s19, 0
      %p64 = por %p62, %p63
      %s65 = sadd.s32 %s20, %s21
      %p66 = scmp.lt.s32.totalorder %s65, 0
      %s67 = scalar_select %p66, %s65, 0
      %s68 = sadd.s32 %s32, %s28
      %p69 = scmp.lt.s32.totalorder %s68, 0
      %s70 = scalar_select %p69, %s68, 0
      %s71 = ssub.s32 %s67, %s70
      %p72 = scmp.eq.s32.totalorder %s71, 0
      %s74 = sadd.s32 %s73, 1
      %s75 = scalar_select %p72, %s73, %s74
      %p78 = pneg %p72
      %p79 = scmp.eq.s32.totalorder %s13, 1
      %p80 = por %p78, %p79
      %p81 = scmp.ne.s32.totalorder %s73, %s76
      %p82 = scmp.eq.s32.totalorder %s13, 0
      %p83 = por %p81, %p82
      %p84 = scmp.ne.s32.totalorder %s73, %s76
      %p85 = scmp.eq.s32.totalorder %s18, 1
      %p86 = por %p84, %p85
      %p87 = scmp.ne.s32.totalorder %s76, %s77
      %p88 = scmp.eq.s32.totalorder %s18, 0
      %p89 = por %p87, %p88
      %p90 = scmp.ne.s32.totalorder %s76, %s77
      %p91 = scmp.eq.s32.totalorder %s19, 1
      %p92 = por %p90, %p91
      %p94 = scmp.ne.s32.totalorder %s77, %s93
      %p95 = scmp.eq.s32.totalorder %s19, 0
      %p96 = por %p94, %p95
      %s97 = sadd.s32 %s20, %s21
      %p98 = scmp.lt.s32.totalorder %s97, 0
      %s99 = scalar_select %p98, %s97, 0
      %s100 = sadd.s32 %s32, %s28
      %p101 = scmp.lt.s32.totalorder %s100, 0
      %s102 = scalar_select %p101, %s100, 0
      %s103 = ssub.s32 %s99, %s102
      %p104 = scmp.eq.s32.totalorder %s103, 0
      %s106 = sadd.s32 %s105, 1
      %s107 = scalar_select %p104, %s105, %s106
      %p110 = pneg %p104
      %p111 = scmp.eq.s32.totalorder %s13, 1
      %p112 = por %p110, %p111
      %p113 = scmp.ne.s32.totalorder %s105, %s108
      %p114 = scmp.eq.s32.totalorder %s13, 0
      %p115 = por %p113, %p114
      %p116 = scmp.ne.s32.totalorder %s105, %s108
      %p117 = scmp.eq.s32.totalorder %s18, 1
      %p118 = por %p116, %p117
      %p119 = scmp.ne.s32.totalorder %s108, %s109
      %p120 = scmp.eq.s32.totalorder %s18, 0
      %p121 = por %p119, %p120
      %p122 = scmp.ne.s32.totalorder %s108, %s109
      %p123 = scmp.eq.s32.totalorder %s19, 1
      %p124 = por %p122, %p123
      %p126 = scmp.ne.s32.totalorder %s109, %s125
      %p127 = scmp.eq.s32.totalorder %s19, 0
      %p128 = por %p126, %p127
      %s130 = sadd.s32 %s129, 1
      %p133 = scmp.eq.s32.totalorder %s13, 1
      %p134 = scmp.ne.s32.totalorder %s129, %s131
      %p135 = scmp.eq.s32.totalorder %s13, 0
      %p136 = por %p134, %p135
      %p137 = scmp.ne.s32.totalorder %s129, %s131
      %p138 = scmp.eq.s32.totalorder %s18, 1
      %p139 = por %p137, %p138
      %p140 = scmp.ne.s32.totalorder %s131, %s132
      %p141 = scmp.eq.s32.totalorder %s18, 0
      %p142 = por %p140, %p141
      %p143 = scmp.ne.s32.totalorder %s131, %s132
      %p144 = scmp.eq.s32.totalorder %s19, 1
      %p145 = por %p143, %p144
      %p147 = scmp.ne.s32.totalorder %s132, %s146
      %p148 = scmp.eq.s32.totalorder %s19, 0
      %p149 = por %p147, %p148
      %s150 = ssub.s32 %s20, %s32
      %p151 = scmp.eq.s32.totalorder %s150, 0
      %s153 = sadd.s32 %s152, 1
      %s154 = scalar_select %p151, %s152, %s153
      %p157 = pneg %p151
      %p158 = scmp.eq.s32.totalorder %s13, 1
      %p159 = por %p157, %p158
      %p160 = scmp.ne.s32.totalorder %s152, %s155
      %p161 = scmp.eq.s32.totalorder %s13, 0
      %p162 = por %p160, %p161
      %p163 = scmp.ne.s32.totalorder %s152, %s155
      %p164 = scmp.eq.s32.totalorder %s18, 1
      %p165 = por %p163, %p164
      %p166 = scmp.ne.s32.totalorder %s155, %s156
      %p167 = scmp.eq.s32.totalorder %s18, 0
      %p168 = por %p166, %p167
      %p169 = scmp.ne.s32.totalorder %s155, %s156
      %p170 = scmp.eq.s32.totalorder %s19, 1
      %p171 = por %p169, %p170
      %p173 = scmp.ne.s32.totalorder %s156, %s172
      %p174 = scmp.eq.s32.totalorder %s19, 0
      %p175 = por %p173, %p174
      %p176 = scmp.le.s32.totalorder 1, %s13
      %p177 = scmp.lt.s32.totalorder %s13, 3
      %p178 = pnand %p176, %p177
      %p179 = pneg %p178
      // Predicated region
      $region9: #{tpu_custom_call.1} parent=5 // pred_check
        _
      $region10: #{tpu_custom_call.1} parent=5 // pred_check_branch
        %181 = sbr.rel (%p178) target = $region12
      $region11: #{tpu_custom_call.1} parent=5 // pred_region
        %s182 = ssub.s32 %s13, 1
        // Predicated region
        $region13: #{tpu_custom_call.1} parent=11 // pred_check
          %p183 = pneg %p142
        $region14: #{tpu_custom_call.1} parent=11 // pred_check_branch
          %185 = sbr.rel (%p183) target = $region16
        $region15: #{tpu_custom_call.1} parent=11 // pred_region
          _
        $region16: #{tpu_custom_call.1} parent=11 // pred_fallthru
          _
      $region12: #{tpu_custom_call.1} parent=5 // pred_fallthru
        _
      %p186 = scmp.lt.s32.totalorder %s13, 2
      // Predicated region
      $region17: #{tpu_custom_call.1} parent=5 // pred_check
        %p187 = pneg %p186
      $region18: #{tpu_custom_call.1} parent=5 // pred_check_branch
        %189 = sbr.rel (%p187) target = $region20
      $region19: #{tpu_custom_call.1} parent=5 // pred_region
        // Predicated region
        $region21: #{tpu_custom_call.1} parent=19 // pred_check
          %p190 = pneg %p51
        $region22: #{tpu_custom_call.1} parent=19 // pred_check_branch
          %192 = sbr.rel (%p190) target = $region24
        $region23: #{tpu_custom_call.1} parent=19 // pred_region
          %s193 = sadd.s32 %s20, %s21
          %p194 = scmp.lt.s32.totalorder %s193, 0
          %s195 = scalar_select %p194, %s193, 0
          %p196 = scmp.lt.s32.totalorder %s195, 0
          %s197 = scalar_select %p196, %s195, 0
          %s198 = smul.addr %s197, 2
          %s199 = scalar_lea.vmem %s0, %s198
          %s200 = sadd.s32 %s20, %s21
          %p201 = scmp.lt.s32.totalorder %s200, 0
          %s202 = scalar_select %p201, %s200, 0
        $region24: #{tpu_custom_call.1} parent=19 // pred_fallthru
          _
        // Predicated region
        $region25: #{tpu_custom_call.1} parent=19 // pred_check
          %p203 = pneg %p83
        $region26: #{tpu_custom_call.1} parent=19 // pred_check_branch
          %205 = sbr.rel (%p203) target = $region28
        $region27: #{tpu_custom_call.1} parent=19 // pred_region
          %s206 = sadd.s32 %s20, %s21
          %p207 = scmp.lt.s32.totalorder %s206, 0
          %s208 = scalar_select %p207, %s206, 0
          %p209 = scmp.lt.s32.totalorder %s208, 0
          %s210 = scalar_select %p209, %s208, 0
          %s211 = smul.addr %s210, 2
          %s212 = scalar_lea.vmem %s1, %s211
          %s213 = sadd.s32 %s20, %s21
          %p214 = scmp.lt.s32.totalorder %s213, 0
          %s215 = scalar_select %p214, %s213, 0
        $region28: #{tpu_custom_call.1} parent=19 // pred_fallthru
          _
        // Predicated region
        $region29: #{tpu_custom_call.1} parent=19 // pred_check
          %p216 = pneg %p115
        $region30: #{tpu_custom_call.1} parent=19 // pred_check_branch
          %218 = sbr.rel (%p216) target = $region32
        $region31: #{tpu_custom_call.1} parent=19 // pred_region
          %s219 = sadd.s32 %s20, %s21
          %p220 = scmp.lt.s32.totalorder %s219, 0
          %s221 = scalar_select %p220, %s219, 0
          %p222 = scmp.lt.s32.totalorder %s221, 0
          %s223 = scalar_select %p222, %s221, 0
          %s224 = smul.addr %s223, 2
          %s225 = scalar_lea.vmem %s2, %s224
          %s226 = sadd.s32 %s20, %s21
          %p227 = scmp.lt.s32.totalorder %s226, 0
          %s228 = scalar_select %p227, %s226, 0
        $region32: #{tpu_custom_call.1} parent=19 // pred_fallthru
          _
      $region20: #{tpu_custom_call.1} parent=5 // pred_fallthru
        _
      %p229 = scmp.le.s32.totalorder 1, %s13
      %p230 = scmp.lt.s32.totalorder %s13, 3
      %p231 = pnand %p229, %p230
      %p232 = pneg %p231
      // Predicated region
      $region33: #{tpu_custom_call.1} parent=5 // pred_check
        _
      $region34: #{tpu_custom_call.1} parent=5 // pred_check_branch
        %234 = sbr.rel (%p231) target = $region36
      $region35: #{tpu_custom_call.1} parent=5 // pred_region
        %s235 = ssub.s32 %s13, 1
        %s236 = sadd.s32 %s22, %s23
        %p237 = scmp.lt.s32.totalorder %s236, 0
        %s238 = scalar_select %p237, %s236, 0
        %p239 = scmp.lt.s32.totalorder %s238, 0
        %s240 = scalar_select %p239, %s238, 0
        %s241 = smul.addr %s240, 2
        %s242 = scalar_lea.vmem %s0, %s241
        %p243 = pneg %p57
        %p244 = pneg %p54
        %s245 = sadd.s32 %s22, %s23
        %p246 = scmp.lt.s32.totalorder %s245, 0
        %s247 = scalar_select %p246, %s245, 0
        %p248 = scmp.lt.s32.totalorder %s247, 0
        %s249 = scalar_select %p248, %s247, 0
        %s250 = smul.addr %s249, 2
        %s251 = scalar_lea.vmem %s1, %s250
        %p252 = pneg %p89
        %p253 = pneg %p86
        %s254 = sadd.s32 %s22, %s23
        %p255 = scmp.lt.s32.totalorder %s254, 0
        %s256 = scalar_select %p255, %s254, 0
        %p257 = scmp.lt.s32.totalorder %s256, 0
        %s258 = scalar_select %p257, %s256, 0
        %s259 = smul.addr %s258, 2
        %s260 = scalar_lea.vmem %s2, %s259
        %p261 = pneg %p121
        %p262 = pneg %p118
        %p263 = pneg %p142
        %p264 = pneg %p139
        %p265 = pneg %p168
        %p266 = pneg %p165
        %s267 = sand.u32 %s155, 1
        %s268 = scalar_lea.sflag [#allocation3], %s267
        %s269 = sand.u32 %s155, 1
        %s270 = smul.addr %s269, 8
        %s271 = scalar_lea.vmem [#allocation2], %s270
        %s272 = sadd.s32 %s22, %s23
        %p273 = scmp.lt.s32.totalorder %s272, 0
        %s274 = scalar_select %p273, %s272, 0
        %p275 = scmp.lt.s32.totalorder %s274, 0
        %s276 = scalar_select %p275, %s274, 0
        %s277 = smul.addr %s276, 2
        %s278 = scalar_lea.vmem %s0, %s277
        %s279 = sadd.s32 %s22, %s23
        %p280 = scmp.lt.s32.totalorder %s279, 0
        %s281 = scalar_select %p280, %s279, 0
        %s282 = sadd.s32 %s22, %s23
        %p283 = scmp.lt.s32.totalorder %s282, 0
        %s284 = scalar_select %p283, %s282, 0
        %p285 = scmp.lt.s32.totalorder %s284, 0
        %s286 = scalar_select %p285, %s284, 0
        %s287 = smul.addr %s286, 2
        %s288 = scalar_lea.vmem %s1, %s287
        %s289 = sadd.s32 %s22, %s23
        %p290 = scmp.lt.s32.totalorder %s289, 0
        %s291 = scalar_select %p290, %s289, 0
        %s292 = sadd.s32 %s22, %s23
        %p293 = scmp.lt.s32.totalorder %s292, 0
        %s294 = scalar_select %p293, %s292, 0
        %p295 = scmp.lt.s32.totalorder %s294, 0
        %s296 = scalar_select %p295, %s294, 0
        %s297 = smul.addr %s296, 2
        %s298 = scalar_lea.vmem %s2, %s297
        %s299 = sadd.s32 %s22, %s23
        %p300 = scmp.lt.s32.totalorder %s299, 0
        %s301 = scalar_select %p300, %s299, 0
        %p302 = scmp.eq.s32.totalorder %s23, 0
        // Predicated region
        $region37: #{tpu_custom_call.1} parent=35 // pred_check
          %p303 = pneg %p302
        $region38: #{tpu_custom_call.1} parent=35 // pred_check_branch
          %305 = sbr.rel (%p303) target = $region40
        $region39: #{tpu_custom_call.1} parent=35 // pred_region
          %306 = vst [vmem:[%s271] sm:$0xff] 0.0
        $region40: #{tpu_custom_call.1} parent=35 // pred_fallthru
          _
        %v307 = vld [vmem:[%s278] sm:$0x3]
        %v308 = vld [vmem:[%s288] sm:$0x3]
        %v309 = vld [vmem:[%s298] sm:$0x3]
        %v310 = vsub.f32 %v307, %v308
        %v311 = vsub.f32 %v307, %v309
        %v312 = vmul.f32 %v310, %v310
        %v313 = vmul.f32 %v311, %v311
        %v314 = vsub.f32 %v312, %v313
        %v315 = vld [vmem:[%s3] sm:$0xff]
        %v316 = vld [vmem:[%s3 + $0x8] sm:$0xff]
        %v317 = vld [vmem:[%s3 + $0x10] sm:$0xff]
        %v318 = vld [vmem:[%s3 + $0x18] sm:$0xff]
        %v319 = vld [vmem:[%s3 + $0x20] sm:$0xff]
        %v320 = vld [vmem:[%s3 + $0x28] sm:$0xff]
        %v321 = vld [vmem:[%s3 + $0x30] sm:$0xff]
        %v322 = vld [vmem:[%s3 + $0x38] sm:$0xff]
        %v323 = vld [vmem:[%s3 + $0x40] sm:$0xff]
        %v324 = vld [vmem:[%s3 + $0x48] sm:$0xff]
        %v325 = vld [vmem:[%s3 + $0x50] sm:$0xff]
        %v326 = vld [vmem:[%s3 + $0x58] sm:$0xff]
        %v327 = vld [vmem:[%s3 + $0x60] sm:$0xff]
        %v328 = vld [vmem:[%s3 + $0x68] sm:$0xff]
        %v329 = vld [vmem:[%s3 + $0x70] sm:$0xff]
        %v330 = vld [vmem:[%s3 + $0x78] sm:$0xff]
        %v331 = vand.u32 %v330, 4294901760
        %332 = vmatpush.msra.mxu0 %v331
        %v333 = vand.u32 %v329, 4294901760
        %334 = vmatpush.msra.mxu0 %v333
        %v335 = vand.u32 %v328, 4294901760
        %336 = vmatpush.msra.mxu0 %v335
        %v337 = vand.u32 %v327, 4294901760
        %338 = vmatpush.msra.mxu0 %v337
        %v339 = vand.u32 %v326, 4294901760
        %340 = vmatpush.msra.mxu0 %v339
        %v341 = vand.u32 %v325, 4294901760
        %342 = vmatpush.msra.mxu0 %v341
        %v343 = vand.u32 %v324, 4294901760
        %344 = vmatpush.msra.mxu0 %v343
        %v345 = vand.u32 %v323, 4294901760
        %346 = vmatpush.msra.mxu0 %v345
        %v347 = vand.u32 %v322, 4294901760
        %348 = vmatpush.msra.mxu0 %v347
        %v349 = vand.u32 %v321, 4294901760
        %350 = vmatpush.msra.mxu0 %v349
        %v351 = vand.u32 %v320, 4294901760
        %352 = vmatpush.msra.mxu0 %v351
        %v353 = vand.u32 %v319, 4294901760
        %354 = vmatpush.msra.mxu0 %v353
        %v355 = vand.u32 %v318, 4294901760
        %356 = vmatpush.msra.mxu0 %v355
        %v357 = vand.u32 %v317, 4294901760
        %358 = vmatpush.msra.mxu0 %v357
        %v359 = vand.u32 %v316, 4294901760
        %360 = vmatpush.msra.mxu0 %v359
        %v361 = vand.u32 %v315, 4294901760
        %362 = vmatpush.msra.mxu0 %v361
        %v363 = vand.u32 %v314, 4294901760
        %v364 = vsub.f32 %v314, %v363
        %v365 = vand.u32 %v364, 4294901760
        %v366 = vsub.f32 %v364, %v365
        %v367 = vand.u32 %v366, 4294901760
        %368 = vmatmul.f32.gmra.mxu0 %v367
        %v369 = vpop.f32.mrf.mxu0
        %v370 = vadd.f32 1.0, %v369
        %371 = vdwg.mxu0
        %v372 = vand.u32 %v330, 4294901760
        %v373 = vsub.f32 %v330, %v372
        %v374 = vand.u32 %v373, 4294901760
        %v375 = vsub.f32 %v373, %v374
        %v376 = vand.u32 %v375, 4294901760
        %377 = vmatpush.msra.mxu0 %v376
        %v378 = vand.u32 %v329, 4294901760
        %v379 = vsub.f32 %v329, %v378
        %v380 = vand.u32 %v379, 4294901760
        %v381 = vsub.f32 %v379, %v380
        %v382 = vand.u32 %v381, 4294901760
        %383 = vmatpush.msra.mxu0 %v382
        %v384 = vand.u32 %v328, 4294901760
        %v385 = vsub.f32 %v328, %v384
        %v386 = vand.u32 %v385, 4294901760
        %v387 = vsub.f32 %v385, %v386
        %v388 = vand.u32 %v387, 4294901760
        %389 = vmatpush.msra.mxu0 %v388
        %v390 = vand.u32 %v327, 4294901760
        %v391 = vsub.f32 %v327, %v390
        %v392 = vand.u32 %v391, 4294901760
        %v393 = vsub.f32 %v391, %v392
        %v394 = vand.u32 %v393, 4294901760
        %395 = vmatpush.msra.mxu0 %v394
        %v396 = vand.u32 %v326, 4294901760
        %v397 = vsub.f32 %v326, %v396
        %v398 = vand.u32 %v397, 4294901760
        %v399 = vsub.f32 %v397, %v398
        %v400 = vand.u32 %v399, 4294901760
        %401 = vmatpush.msra.mxu0 %v400
        %v402 = vand.u32 %v325, 4294901760
        %v403 = vsub.f32 %v325, %v402
        %v404 = vand.u32 %v403, 4294901760
        %v405 = vsub.f32 %v403, %v404
        %v406 = vand.u32 %v405, 4294901760
        %407 = vmatpush.msra.mxu0 %v406
        %v408 = vand.u32 %v324, 4294901760
        %v409 = vsub.f32 %v324, %v408
        %v410 = vand.u32 %v409, 4294901760
        %v411 = vsub.f32 %v409, %v410
        %v412 = vand.u32 %v411, 4294901760
        %413 = vmatpush.msra.mxu0 %v412
        %v414 = vand.u32 %v323, 4294901760
        %v415 = vsub.f32 %v323, %v414
        %v416 = vand.u32 %v415, 4294901760
        %v417 = vsub.f32 %v415, %v416
        %v418 = vand.u32 %v417, 4294901760
        %419 = vmatpush.msra.mxu0 %v418
        %v420 = vand.u32 %v322, 4294901760
        %v421 = vsub.f32 %v322, %v420
        %v422 = vand.u32 %v421, 4294901760
        %v423 = vsub.f32 %v421, %v422
        %v424 = vand.u32 %v423, 4294901760
        %425 = vmatpush.msra.mxu0 %v424
        %v426 = vand.u32 %v321, 4294901760
        %v427 = vsub.f32 %v321, %v426
        %v428 = vand.u32 %v427, 4294901760
        %v429 = vsub.f32 %v427, %v428
        %v430 = vand.u32 %v429, 4294901760
        %431 = vmatpush.msra.mxu0 %v430
        %v432 = vand.u32 %v320, 4294901760
        %v433 = vsub.f32 %v320, %v432
        %v434 = vand.u32 %v433, 4294901760
        %v435 = vsub.f32 %v433, %v434
        %v436 = vand.u32 %v435, 4294901760
        %437 = vmatpush.msra.mxu0 %v436
        %v438 = vand.u32 %v319, 4294901760
        %v439 = vsub.f32 %v319, %v438
        %v440 = vand.u32 %v439, 4294901760
        %v441 = vsub.f32 %v439, %v440
        %v442 = vand.u32 %v441, 4294901760
        %443 = vmatpush.msra.mxu0 %v442
        %v444 = vand.u32 %v318, 4294901760
        %v445 = vsub.f32 %v318, %v444
        %v446 = vand.u32 %v445, 4294901760
        %v447 = vsub.f32 %v445, %v446
        %v448 = vand.u32 %v447, 4294901760
        %449 = vmatpush.msra.mxu0 %v448
        %v450 = vand.u32 %v317, 4294901760
        %v451 = vsub.f32 %v317, %v450
        %v452 = vand.u32 %v451, 4294901760
        %v453 = vsub.f32 %v451, %v452
        %v454 = vand.u32 %v453, 4294901760
        %455 = vmatpush.msra.mxu0 %v454
        %v456 = vand.u32 %v316, 4294901760
        %v457 = vsub.f32 %v316, %v456
        %v458 = vand.u32 %v457, 4294901760
        %v459 = vsub.f32 %v457, %v458
        %v460 = vand.u32 %v459, 4294901760
        %461 = vmatpush.msra.mxu0 %v460
        %v462 = vand.u32 %v315, 4294901760
        %v463 = vsub.f32 %v315, %v462
        %v464 = vand.u32 %v463, 4294901760
        %v465 = vsub.f32 %v463, %v464
        %v466 = vand.u32 %v465, 4294901760
        %467 = vmatpush.msra.mxu0 %v466
        %v468 = vand.u32 %v314, 4294901760
        %469 = vmatmul.f32.gmra.mxu0 %v468
        %v470 = vpop.f32.mrf.mxu0
        %v471 = vadd.f32 %v370, %v470
        %472 = vdwg.mxu0
        %v473 = vand.u32 %v330, 4294901760
        %v474 = vsub.f32 %v330, %v473
        %475 = vmatpush.msra.mxu0 %v474
        %v476 = vand.u32 %v329, 4294901760
        %v477 = vsub.f32 %v329, %v476
        %478 = vmatpush.msra.mxu0 %v477
        %v479 = vand.u32 %v328, 4294901760
        %v480 = vsub.f32 %v328, %v479
        %481 = vmatpush.msra.mxu0 %v480
        %v482 = vand.u32 %v327, 4294901760
        %v483 = vsub.f32 %v327, %v482
        %484 = vmatpush.msra.mxu0 %v483
        %v485 = vand.u32 %v326, 4294901760
        %v486 = vsub.f32 %v326, %v485
        %487 = vmatpush.msra.mxu0 %v486
        %v488 = vand.u32 %v325, 4294901760
        %v489 = vsub.f32 %v325, %v488
        %490 = vmatpush.msra.mxu0 %v489
        %v491 = vand.u32 %v324, 4294901760
        %v492 = vsub.f32 %v324, %v491
        %493 = vmatpush.msra.mxu0 %v492
        %v494 = vand.u32 %v323, 4294901760
        %v495 = vsub.f32 %v323, %v494
        %496 = vmatpush.msra.mxu0 %v495
        %v497 = vand.u32 %v322, 4294901760
        %v498 = vsub.f32 %v322, %v497
        %499 = vmatpush.msra.mxu0 %v498
        %v500 = vand.u32 %v321, 4294901760
        %v501 = vsub.f32 %v321, %v500
        %502 = vmatpush.msra.mxu0 %v501
        %v503 = vand.u32 %v320, 4294901760
        %v504 = vsub.f32 %v320, %v503
        %505 = vmatpush.msra.mxu0 %v504
        %v506 = vand.u32 %v319, 4294901760
        %v507 = vsub.f32 %v319, %v506
        %508 = vmatpush.msra.mxu0 %v507
        %v509 = vand.u32 %v318, 4294901760
        %v510 = vsub.f32 %v318, %v509
        %511 = vmatpush.msra.mxu0 %v510
        %v512 = vand.u32 %v317, 4294901760
        %v513 = vsub.f32 %v317, %v512
        %514 = vmatpush.msra.mxu0 %v513
        %v515 = vand.u32 %v316, 4294901760
        %v516 = vsub.f32 %v316, %v515
        %517 = vmatpush.msra.mxu0 %v516
        %v518 = vand.u32 %v315, 4294901760
        %v519 = vsub.f32 %v315, %v518
        %520 = vmatpush.msra.mxu0 %v519
        %v521 = vand.u32 %v314, 4294901760
        %v522 = vsub.f32 %v314, %v521
        %523 = vmatmul.f32.gmra.mxu0 %v522
        %v524 = vpop.f32.mrf.mxu0
        %v525 = vadd.f32 %v471, %v524
        %526 = vdwg.mxu0
        %v527 = vand.u32 %v330, 4294901760
        %528 = vmatpush.msra.mxu0 %v527
        %v529 = vand.u32 %v329, 4294901760
        %530 = vmatpush.msra.mxu0 %v529
        %v531 = vand.u32 %v328, 4294901760
        %532 = vmatpush.msra.mxu0 %v531
        %v533 = vand.u32 %v327, 4294901760
        %534 = vmatpush.msra.mxu0 %v533
        %v535 = vand.u32 %v326, 4294901760
        %536 = vmatpush.msra.mxu0 %v535
        %v537 = vand.u32 %v325, 4294901760
        %538 = vmatpush.msra.mxu0 %v537
        %v539 = vand.u32 %v324, 4294901760
        %540 = vmatpush.msra.mxu0 %v539
        %v541 = vand.u32 %v323, 4294901760
        %542 = vmatpush.msra.mxu0 %v541
        %v543 = vand.u32 %v322, 4294901760
        %544 = vmatpush.msra.mxu0 %v543
        %v545 = vand.u32 %v321, 4294901760
        %546 = vmatpush.msra.mxu0 %v545
        %v547 = vand.u32 %v320, 4294901760
        %548 = vmatpush.msra.mxu0 %v547
        %v549 = vand.u32 %v319, 4294901760
        %550 = vmatpush.msra.mxu0 %v549
        %v551 = vand.u32 %v318, 4294901760
        %552 = vmatpush.msra.mxu0 %v551
        %v553 = vand.u32 %v317, 4294901760
        %554 = vmatpush.msra.mxu0 %v553
        %v555 = vand.u32 %v316, 4294901760
        %556 = vmatpush.msra.mxu0 %v555
        %v557 = vand.u32 %v315, 4294901760
        %558 = vmatpush.msra.mxu0 %v557
        %v559 = vand.u32 %v314, 4294901760
        %v560 = vsub.f32 %v314, %v559
        %v561 = vand.u32 %v560, 4294901760
        %562 = vmatmul.f32.gmra.mxu0 %v561
        %v563 = vpop.f32.mrf.mxu0
        %v564 = vadd.f32 %v525, %v563
        %565 = vdwg.mxu0
        %v566 = vand.u32 %v330, 4294901760
        %v567 = vsub.f32 %v330, %v566
        %v568 = vand.u32 %v567, 4294901760
        %569 = vmatpush.msra.mxu0 %v568
        %v570 = vand.u32 %v329, 4294901760
        %v571 = vsub.f32 %v329, %v570
        %v572 = vand.u32 %v571, 4294901760
        %573 = vmatpush.msra.mxu0 %v572
        %v574 = vand.u32 %v328, 4294901760
        %v575 = vsub.f32 %v328, %v574
        %v576 = vand.u32 %v575, 4294901760
        %577 = vmatpush.msra.mxu0 %v576
        %v578 = vand.u32 %v327, 4294901760
        %v579 = vsub.f32 %v327, %v578
        %v580 = vand.u32 %v579, 4294901760
        %581 = vmatpush.msra.mxu0 %v580
        %v582 = vand.u32 %v326, 4294901760
        %v583 = vsub.f32 %v326, %v582
        %v584 = vand.u32 %v583, 4294901760
        %585 = vmatpush.msra.mxu0 %v584
        %v586 = vand.u32 %v325, 4294901760
        %v587 = vsub.f32 %v325, %v586
        %v588 = vand.u32 %v587, 4294901760
        %589 = vmatpush.msra.mxu0 %v588
        %v590 = vand.u32 %v324, 4294901760
        %v591 = vsub.f32 %v324, %v590
        %v592 = vand.u32 %v591, 4294901760
        %593 = vmatpush.msra.mxu0 %v592
        %v594 = vand.u32 %v323, 4294901760
        %v595 = vsub.f32 %v323, %v594
        %v596 = vand.u32 %v595, 4294901760
        %597 = vmatpush.msra.mxu0 %v596
        %v598 = vand.u32 %v322, 4294901760
        %v599 = vsub.f32 %v322, %v598
        %v600 = vand.u32 %v599, 4294901760
        %601 = vmatpush.msra.mxu0 %v600
        %v602 = vand.u32 %v321, 4294901760
        %v603 = vsub.f32 %v321, %v602
        %v604 = vand.u32 %v603, 4294901760
        %605 = vmatpush.msra.mxu0 %v604
        %v606 = vand.u32 %v320, 4294901760
        %v607 = vsub.f32 %v320, %v606
        %v608 = vand.u32 %v607, 4294901760
        %609 = vmatpush.msra.mxu0 %v608
        %v610 = vand.u32 %v319, 4294901760
        %v611 = vsub.f32 %v319, %v610
        %v612 = vand.u32 %v611, 4294901760
        %613 = vmatpush.msra.mxu0 %v612
        %v614 = vand.u32 %v318, 4294901760
        %v615 = vsub.f32 %v318, %v614
        %v616 = vand.u32 %v615, 4294901760
        %617 = vmatpush.msra.mxu0 %v616
        %v618 = vand.u32 %v317, 4294901760
        %v619 = vsub.f32 %v317, %v618
        %v620 = vand.u32 %v619, 4294901760
        %621 = vmatpush.msra.mxu0 %v620
        %v622 = vand.u32 %v316, 4294901760
        %v623 = vsub.f32 %v316, %v622
        %v624 = vand.u32 %v623, 4294901760
        %625 = vmatpush.msra.mxu0 %v624
        %v626 = vand.u32 %v315, 4294901760
        %v627 = vsub.f32 %v315, %v626
        %v628 = vand.u32 %v627, 4294901760
        %629 = vmatpush.msra.mxu0 %v628
        %v630 = vand.u32 %v314, 4294901760
        %631 = vmatmul.f32.gmra.mxu0 %v630
        %v632 = vpop.f32.mrf.mxu0
        %v633 = vadd.f32 %v564, %v632
        %634 = vdwg.mxu0
        %v635 = vand.u32 %v330, 4294901760
        %636 = vmatpush.msra.mxu0 %v635
        %v637 = vand.u32 %v329, 4294901760
        %638 = vmatpush.msra.mxu0 %v637
        %v639 = vand.u32 %v328, 4294901760
        %640 = vmatpush.msra.mxu0 %v639
        %v641 = vand.u32 %v327, 4294901760
        %642 = vmatpush.msra.mxu0 %v641
        %v643 = vand.u32 %v326, 4294901760
        %644 = vmatpush.msra.mxu0 %v643
        %v645 = vand.u32 %v325, 4294901760
        %646 = vmatpush.msra.mxu0 %v645
        %v647 = vand.u32 %v324, 4294901760
        %648 = vmatpush.msra.mxu0 %v647
        %v649 = vand.u32 %v323, 4294901760
        %650 = vmatpush.msra.mxu0 %v649
        %v651 = vand.u32 %v322, 4294901760
        %652 = vmatpush.msra.mxu0 %v651
        %v653 = vand.u32 %v321, 4294901760
        %654 = vmatpush.msra.mxu0 %v653
        %v655 = vand.u32 %v320, 4294901760
        %656 = vmatpush.msra.mxu0 %v655
        %v657 = vand.u32 %v319, 4294901760
        %658 = vmatpush.msra.mxu0 %v657
        %v659 = vand.u32 %v318, 4294901760
        %660 = vmatpush.msra.mxu0 %v659
        %v661 = vand.u32 %v317, 4294901760
        %662 = vmatpush.msra.mxu0 %v661
        %v663 = vand.u32 %v316, 4294901760
        %664 = vmatpush.msra.mxu0 %v663
        %v665 = vand.u32 %v315, 4294901760
        %666 = vmatpush.msra.mxu0 %v665
        %v667 = vand.u32 %v314, 4294901760
        %668 = vmatmul.f32.gmra.mxu0 %v667
        %v669 = vpop.f32.mrf.mxu0
        %v670 = vadd.f32 %v633, %v669
        %671 = vdwg.mxu0
        %v672 = vmax.f32 %v670, 0.0
        %s673 = sadd.s32 %s22, %s23
        %v674 = vlaneseq
        %v675 = vshrl.u32 %v674, 7
        %v676 = vlaneseq
        %v677 = vand.u32 %v676, 127
        %s678 = smul.u32 %s673, 2
        %v679 = vstv %s678
        %v680 = vadd.s32 %v679, %v675
        %v681 = vmul.u32 %v680, 4
        %v682 = vadd.s32 %v681, %v677
        %vm683 = vcmp.lt.s32.totalorder %v682, 8
        %v684 = vsel %vm683, %v672, 0.0
        %v685 = vld [vmem:[%s271] sm:$0xff]
        %vm686 = vcmask 25600
        %v687 = vsel %vm686, %v684, 0.0
        %688 = vadd.xlane.f32.xlu0 %v687
        %v689 = vpop.xlane.xlu0 %688
        %v690 = vrot.slane %v689, 4
        %v691 = vadd.f32 %v689, %v690
        %v692 = vrot.slane %v691, 2
        %v693 = vadd.f32 %v691, %v692
        %v694 = vrot.slane %v693, 1
        %v695 = vadd.f32 %v693, %v694
        %s696 = vtos %v695
        %v697 = vstv %s696
        %v698 = vadd.f32 %v685, %v697
        %699 = vst [vmem:[%s271] sm:$0xff] %v698
        %s700 = sand.u32 %s155, 1
        %s701 = scalar_lea.sflag [#allocation3], %s700
        %s702 = sand.u32 %s155, 1
        %s703 = smul.addr %s702, 8
        %s704 = scalar_lea.vmem [#allocation2], %s703
        // Predicated region
        $region41: #{tpu_custom_call.1} parent=35 // pred_check
          %p705 = pneg %p165
        $region42: #{tpu_custom_call.1} parent=35 // pred_check_branch
          %707 = sbr.rel (%p705) target = $region44
        $region43: #{tpu_custom_call.1} parent=35 // pred_region
          %709 = vsyncadd %s701, 0
          %s710 = smul.addr %s22, 8
          %s711 = scalar_lea.hbm %s4, %s710
          %s713 = sshll.u32 %s704, 4
          %s714 = int_to_ptr.vmem [resolvable:$true] %s713
          %s715 = sshll.u32 %s711, 4
          %s716 = int_to_ptr.hbm [resolvable:$true] %s715
          %718 = dma.vmem_to_hbm [thread:$0]  %s714, 128, %s716, %s701
        $region44: #{tpu_custom_call.1} parent=35 // pred_fallthru
          _
      $region36: #{tpu_custom_call.1} parent=5 // pred_fallthru
        _
      %p719 = scmp.le.s32.totalorder 2, %s13
      // Predicated region
      $region45: #{tpu_custom_call.1} parent=5 // pred_check
        %p720 = pneg %p719
      $region46: #{tpu_custom_call.1} parent=5 // pred_check_branch
        %722 = sbr.rel (%p720) target = $region48
      $region47: #{tpu_custom_call.1} parent=5 // pred_region
        %s723 = ssub.s32 %s13, 2
        // Predicated region
        $region49: #{tpu_custom_call.1} parent=47 // pred_check
          %p724 = pneg %p171
        $region50: #{tpu_custom_call.1} parent=47 // pred_check_branch
          %726 = sbr.rel (%p724) target = $region52
        $region51: #{tpu_custom_call.1} parent=47 // pred_region
          %s727 = sand.u32 %s156, 1
          %s728 = scalar_lea.sflag [#allocation3], %s727
          %s729 = sand.u32 %s156, 1
          %s730 = smul.addr %s729, 8
          %s731 = scalar_lea.vmem [#allocation2], %s730
          %733 = dma.done %s728, 128
        $region52: #{tpu_custom_call.1} parent=47 // pred_fallthru
          _
      $region48: #{tpu_custom_call.1} parent=5 // pred_fallthru
        _
    $region6: #{tpu_custom_call.1} parent=1 // loop_footer
      %s17 = sadd.s32 1, %s13
    $region7: #{tpu_custom_call.1} parent=1 // loop_footer_branch
      %12 = sbr.rel target = $region3
    $region8: #{tpu_custom_call.1} parent=1 // loop_exit
      _
    %734 = vsyncpa [#allocation3], 1
    %s735 = scalar_lea.sflag [#allocation3], 1
    %736 = vsyncpa %s735, 1

</llo_original>
